<compile_context>
chip_gen: v6e
topology: v6e:2x2x1
jax: 0.10.0
libtpu: 0.0.40
codegen_flags: <defaults>
</compile_context>

<pallas_src>
import functools

import jax
import jax.numpy as jnp
from jax.experimental import pallas as pl
from jax.experimental.pallas import tpu as pltpu

LANES = 128  # lane width of all packed slabs


def _round_up(n, m):
    return (n + m - 1) // m * m


# One row per 1-D parameter/constant in the f32 vector slab.
_VEC_ROWS = {
    "e_c1_sqn": 0, "e_w1_neg": 1, "e_hb": 2,
    "e_c2_sqn": 3, "e_w2_neg": 4, "mv_b": 5,
    "d_c1_sqn": 6, "d_w1_neg": 7, "d_hb": 8,
    "d_c2_sqn": 9, "d_w2_neg": 10, "o_b": 11,
}
_VEC_SLAB_ROWS = 16  # padded to the f32 (8,128) tile


def _make_layout(I, H, L, O):
    """Static row layout of the bf16 matrix slab (row starts 16-aligned for bf16)."""
    blocks = [
        ("e_c1_t", I, H),        # encoder rbf_input centers^T, scaled by 1/w^2   (I, H)
        ("e_hw_t", H, H),        # encoder hidden Linear weight^T                 (H, H)
        ("e_c2_t", H, H),        # encoder rbf_hidden centers^T, scaled           (H, H)
        ("mv_w_t", H, 2 * L),    # fused [fc_mean | fc_log_var] weight^T          (H, 2L)
        ("d_c1_t", L, H),        # decoder rbf_hidden centers^T, scaled           (L, H)
        ("d_hw_t", H, H),        # decoder fc_hidden weight^T                     (H, H)
        ("d_c2_t", H, O),        # decoder rbf_output centers^T, scaled           (H, O)
        ("o_w_t",  O, O),        # fc_output weight^T                             (O, O)
    ]
    layout, row = {}, 0
    for name, r, c in blocks:
        assert c <= LANES
        layout[name] = (row, r, c)
        row += _round_up(r, 16)
    return layout, _round_up(row, 16)


def pack_params(params, input_dim, hidden_dim, latent_dim, output_dim):
    """One-time wrapper-side packing.

    Returns (mat_slab_bf16, vec_slab_f32):
      * mat_slab: all MXU operands, pre-transposed; RBF centers additionally
        column-scaled by 1/w_j^2 so the kernel needs no '2*' or '*neg' multiplies.
      * vec_slab: biases, neg_j = -1/(2 w_j^2), and csq_neg_j = sum(C_j^2)*neg_j.
    """
    I, H, L, O = input_dim, hidden_dim, latent_dim, output_dim
    layout, total_rows = _make_layout(I, H, L, O)
    mat_slab = jnp.zeros((total_rows, LANES), jnp.float32)
    vec_slab = jnp.zeros((_VEC_SLAB_ROWS, LANES), jnp.float32)

    def put_mat(s, name, m):
        r0, nr, nc = layout[name]
        assert m.shape == (nr, nc), (name, m.shape, (nr, nc))
        return s.at[r0:r0 + nr, :nc].set(m.astype(jnp.float32))

    def put_vec(s, key, v):
        v = jnp.asarray(v, jnp.float32).reshape(-1)
        return s.at[_VEC_ROWS[key], :v.shape[0]].set(v)

    def rbf_fold(centers, widths):
        # arg = neg*||a-c||^2 = a_sq*neg + (c_sq*neg) + a @ (C^T * (-2*neg))
        neg = -1.0 / (2.0 * jnp.square(jnp.asarray(widths, jnp.float32).reshape(-1)))
        ct_scaled = centers.astype(jnp.float32).T * (-2.0 * neg)[None, :]   # (D, M)
        csq_neg = jnp.sum(centers.astype(jnp.float32) ** 2, axis=1) * neg   # (M,)
        return ct_scaled, csq_neg, neg

    # ---- encoder ----
    ct, csq, neg = rbf_fold(params["e_rbf_in_c"], params["e_rbf_in_w"])
    mat_slab = put_mat(mat_slab, "e_c1_t", ct)
    vec_slab = put_vec(vec_slab, "e_c1_sqn", csq)
    vec_slab = put_vec(vec_slab, "e_w1_neg", neg)

    mat_slab = put_mat(mat_slab, "e_hw_t", params["e_hidden_w"].T)
    vec_slab = put_vec(vec_slab, "e_hb", params["e_hidden_b"])

    ct, csq, neg = rbf_fold(params["e_rbf_hid_c"], params["e_rbf_hid_w"])
    mat_slab = put_mat(mat_slab, "e_c2_t", ct)
    vec_slab = put_vec(vec_slab, "e_c2_sqn", csq)
    vec_slab = put_vec(vec_slab, "e_w2_neg", neg)

    mv_w_t = jnp.concatenate([params["fc_mean_w"].T, params["fc_logvar_w"].T], axis=1)
    mv_b = jnp.concatenate([params["fc_mean_b"].reshape(-1),
                            params["fc_logvar_b"].reshape(-1)])
    mat_slab = put_mat(mat_slab, "mv_w_t", mv_w_t)
    vec_slab = put_vec(vec_slab, "mv_b", mv_b)

    # ---- decoder ----
    ct, csq, neg = rbf_fold(params["d_rbf_hid_c"], params["d_rbf_hid_w"])
    mat_slab = put_mat(mat_slab, "d_c1_t", ct)
    vec_slab = put_vec(vec_slab, "d_c1_sqn", csq)
    vec_slab = put_vec(vec_slab, "d_w1_neg", neg)

    mat_slab = put_mat(mat_slab, "d_hw_t", params["d_fc_hidden_w"].T)
    vec_slab = put_vec(vec_slab, "d_hb", params["d_fc_hidden_b"])

    ct, csq, neg = rbf_fold(params["d_rbf_out_c"], params["d_rbf_out_w"])
    mat_slab = put_mat(mat_slab, "d_c2_t", ct)
    vec_slab = put_vec(vec_slab, "d_c2_sqn", csq)
    vec_slab = put_vec(vec_slab, "d_w2_neg", neg)

    mat_slab = put_mat(mat_slab, "o_w_t", params["fc_output_w"].T)
    vec_slab = put_vec(vec_slab, "o_b", params["fc_output_b"])

    return mat_slab.astype(jnp.bfloat16), vec_slab


def _vae_rbf_kernel(x_ref, noise_ref, pm_ref, pv_ref, out_ref, *, layout, I, H, L, O):
    """One batch tile: encoder + reparameterize + decoder, all fused."""

    def mat(name):
        r0, nr, nc = layout[name]
        return pm_ref[r0:r0 + nr, 0:nc]          # bf16, static slice -> free view

    def vec(key, n):
        r = _VEC_ROWS[key]
        return pv_ref[r:r + 1, 0:n]              # f32 (1, n) row

    def rbf(a, name_c, key_csq, key_neg):
        # centers pre-transposed (D, M) and column-scaled by 1/w^2 (wrapper-side).
        _, _, m = layout[name_c]
        a_sq = jnp.sum(a * a, axis=1, keepdims=True)                    # (B, 1) VPU
        cross = jnp.dot(a.astype(jnp.bfloat16), mat(name_c),
                        preferred_element_type=jnp.float32)             # (B, M) MXU
        arg = a_sq * vec(key_neg, m) + vec(key_csq, m) + cross          # = -d2/(2w^2)
        return jnp.exp(jnp.minimum(arg, 0.0))                           # EUP, f32

    def linear(a, name_w, key_b):
        _, _, n = layout[name_w]
        return jnp.dot(a.astype(jnp.bfloat16), mat(name_w),
                       preferred_element_type=jnp.float32) + vec(key_b, n)

    x = x_ref[...]                               # (TB, I) f32
    noise = noise_ref[...]                       # (TB, L) f32

    # ---------------- Encoder ----------------
    h = rbf(x, "e_c1_t", "e_c1_sqn", "e_w1_neg")                 # (TB, H)
    h = jnp.tanh(linear(h, "e_hw_t", "e_hb"))                    # (TB, H)
    t = jnp.tanh(rbf(h, "e_c2_t", "e_c2_sqn", "e_w2_neg"))       # (TB, H)

    ml = linear(t, "mv_w_t", "mv_b")                             # (TB, 2L) fused
    mean = ml[:, 0:L]
    log_var = ml[:, L:2 * L]
    std = jnp.exp(0.5 * log_var)                                 # torch calls this "var"
    z = mean + noise * std

    # ---------------- Decoder ----------------
    g = rbf(z, "d_c1_t", "d_c1_sqn", "d_w1_neg")                 # (TB, H)
    g = jnp.tanh(linear(g, "d_hw_t", "d_hb"))                    # (TB, H)
    g = rbf(g, "d_c2_t", "d_c2_sqn", "d_w2_neg")                 # (TB, O)
    out = linear(jnp.tanh(g), "o_w_t", "o_b")                    # (TB, O)

    # Lane-dense packed output block: [out | z | mean | std | log_var | zero pad]
    out_ref[:, 0:O] = out
    out_ref[:, O:O + L] = z
    out_ref[:, O + L:O + 2 * L] = mean
    out_ref[:, O + 2 * L:O + 3 * L] = std
    out_ref[:, O + 3 * L:O + 4 * L] = log_var
    pad_w = LANES - (O + 4 * L)
    if pad_w:
        out_ref[:, O + 4 * L:LANES] = jnp.zeros((out_ref.shape[0], pad_w), jnp.float32)


def make_vae_rbf_forward(input_dim, hidden_dim, latent_dim, output_dim, tile_b=128):
    """Returns jitted forward(x, noise, mat_slab, vec_slab) -> (out, z, mean, var, log_var)."""
    I, H, L, O = input_dim, hidden_dim, latent_dim, output_dim
    assert O + 4 * L <= LANES, "packed outputs must fit one 128-lane slab"
    assert max(I, H, O, 2 * L) <= LANES
    assert tile_b % 8 == 0
    layout, _ = _make_layout(I, H, L, O)
    kernel = functools.partial(_vae_rbf_kernel, layout=layout, I=I, H=H, L=L, O=O)

    def forward(x, noise, mat_slab, vec_slab):
        B = x.shape[0]
        x = x.astype(jnp.float32)
        noise = noise.astype(jnp.float32)
        b_pad = _round_up(B, tile_b)
        if b_pad != B:
            # Zero-padded tail rows compute harmless values and are sliced off below.
            x = jnp.pad(x, ((0, b_pad - B), (0, 0)))
            noise = jnp.pad(noise, ((0, b_pad - B), (0, 0)))
        n_tiles = b_pad // tile_b

        packed = pl.pallas_call(
            kernel,
            out_shape=jax.ShapeDtypeStruct((b_pad, LANES), jnp.float32),
            grid=(n_tiles,),
            in_specs=[
                pl.BlockSpec((tile_b, I), lambda i: (i, 0)),         # x tile
                pl.BlockSpec((tile_b, L), lambda i: (i, 0)),         # noise tile
                pl.BlockSpec(mat_slab.shape, lambda i: (0, 0)),      # params: DMA'd once
                pl.BlockSpec(vec_slab.shape, lambda i: (0, 0)),      # consts: DMA'd once
            ],
            out_specs=pl.BlockSpec((tile_b, LANES), lambda i: (i, 0)),
            compiler_params=pltpu.CompilerParams(
                dimension_semantics=("parallel",)),                  # 2 TCs on v7x
        )(x, noise, mat_slab, vec_slab)

        packed = packed[:B]
        output = packed[:, 0:O]
        z = packed[:, O:O + L]
        mean = packed[:, O + L:O + 2 * L]
        var = packed[:, O + 2 * L:O + 3 * L]      # actually the std (torch naming)
        log_var = packed[:, O + 3 * L:O + 4 * L]
        return output, z, mean, var, log_var

    return jax.jit(forward)


# ----------------------------- pure-JAX reference -----------------------------
def vae_rbf_reference(x, noise, p):
    hi = jax.lax.Precision.HIGHEST

    def rbf(a, centers, w):
        d2 = jnp.sum((a[:, None, :] - centers[None, :, :]) ** 2, axis=2)
        return jnp.exp(-d2 / (2.0 * w[None, :] ** 2))

    def lin(a, w, b):
        return jnp.dot(a, w.T, precision=hi) + b[None, :]

    h = rbf(x, p["e_rbf_in_c"], p["e_rbf_in_w"])
    h = jnp.tanh(lin(h, p["e_hidden_w"], p["e_hidden_b"]))
    t = jnp.tanh(rbf(h, p["e_rbf_hid_c"], p["e_rbf_hid_w"]))
    mean = lin(t, p["fc_mean_w"], p["fc_mean_b"])
    log_var = lin(t, p["fc_logvar_w"], p["fc_logvar_b"])
    var = jnp.exp(0.5 * log_var)
    z = mean + noise * var
    g = rbf(z, p["d_rbf_hid_c"], p["d_rbf_hid_w"])
    g = jnp.tanh(lin(g, p["d_fc_hidden_w"], p["d_fc_hidden_b"]))
    g = rbf(g, p["d_rbf_out_c"], p["d_rbf_out_w"])
    out = lin(jnp.tanh(g), p["fc_output_w"], p["fc_output_b"])
    return out, z, mean, var, log_var


def init_params(key, input_dim, hidden_dim, latent_dim, output_dim):
    """Deterministic synthetic parameter init (shapes match the torch module)."""
    ks = jax.random.split(key, 18)
    n = lambda k, s: jax.random.normal(k, s, dtype=jnp.float32)

    def lin(kw, kb, out_d, in_d):
        bound = 1.0 / jnp.sqrt(jnp.float32(in_d))
        w = jax.random.uniform(kw, (out_d, in_d), jnp.float32, -bound, bound)
        b = jax.random.uniform(kb, (out_d,), jnp.float32, -bound, bound)
        return w, b

    def widths(k, m):
        w = n(k, (m,))                 # torch.randn widths; keep away from zero
        return jnp.where(jnp.abs(w) < 0.1, 0.1, w)

    p = {}
    # Encoder
    p["e_rbf_in_c"] = n(ks[0], (hidden_dim, input_dim))
    p["e_rbf_in_w"] = widths(ks[1], hidden_dim)
    p["e_hidden_w"], p["e_hidden_b"] = lin(ks[2], ks[3], hidden_dim, hidden_dim)
    p["e_rbf_hid_c"] = n(ks[4], (hidden_dim, hidden_dim))
    p["e_rbf_hid_w"] = widths(ks[5], hidden_dim)
    p["fc_mean_w"], p["fc_mean_b"] = lin(ks[6], ks[7], latent_dim, hidden_dim)
    p["fc_logvar_w"], p["fc_logvar_b"] = lin(ks[8], ks[9], latent_dim, hidden_dim)
    # Decoder
    p["d_rbf_hid_c"] = n(ks[10], (hidden_dim, latent_dim))
    p["d_rbf_hid_w"] = widths(ks[11], hidden_dim)
    p["d_fc_hidden_w"], p["d_fc_hidden_b"] = lin(ks[12], ks[13], hidden_dim, hidden_dim)
    p["d_rbf_out_c"] = n(ks[14], (output_dim, hidden_dim))
    p["d_rbf_out_w"] = widths(ks[15], output_dim)
    p["fc_output_w"], p["fc_output_b"] = lin(ks[16], ks[17], output_dim, output_dim)
    return p


if __name__ == "__main__":
    INPUT_DIM, HIDDEN_DIM, LATENT_DIM, OUTPUT_DIM = 32, 32, 16, 32

    key = jax.random.PRNGKey(0)
    k_params, k_x1, k_n1, k_x2, k_n2 = jax.random.split(key, 5)

    params = init_params(k_params, INPUT_DIM, HIDDEN_DIM, LATENT_DIM, OUTPUT_DIM)
    mat_slab, vec_slab = pack_params(params, INPUT_DIM, HIDDEN_DIM, LATENT_DIM, OUTPUT_DIM)

    def check(got, want):
        assert got.shape == want.shape, (got.shape, want.shape)
        assert bool(jnp.all(jnp.isfinite(got)))
        assert bool(jnp.allclose(got, want, rtol=1e-2, atol=1e-2)), \
            float(jnp.max(jnp.abs(got - want)))

    # ---- small parity run: B=8, single tile (tile_b=8) ----
    B1 = 8
    x1 = jax.random.normal(k_x1, (B1, INPUT_DIM), dtype=jnp.float32)
    noise1 = jax.random.normal(k_n1, (B1, LATENT_DIM), dtype=jnp.float32)
    fwd_small = make_vae_rbf_forward(INPUT_DIM, HIDDEN_DIM, LATENT_DIM, OUTPUT_DIM, tile_b=8)
    got1 = jax.block_until_ready(fwd_small(x1, noise1, mat_slab, vec_slab))
    ref1 = vae_rbf_reference(x1, noise1, params)
    for g, w in zip(got1, ref1):
        check(g, w)
    assert got1[0].shape == (B1, OUTPUT_DIM)
    assert bool(jnp.all(got1[3] > 0))            # std > 0

    # ---- batch-grid run: B=200 -> padded to 256, grid=(2,), parallel axis ----
    B2 = 200
    x2 = jax.random.normal(k_x2, (B2, INPUT_DIM), dtype=jnp.float32)
    noise2 = jax.random.normal(k_n2, (B2, LATENT_DIM), dtype=jnp.float32)
    fwd = make_vae_rbf_forward(INPUT_DIM, HIDDEN_DIM, LATENT_DIM, OUTPUT_DIM, tile_b=128)
    got2 = jax.block_until_ready(fwd(x2, noise2, mat_slab, vec_slab))
    ref2 = vae_rbf_reference(x2, noise2, params)
    for g, w in zip(got2, ref2):
        check(g, w)

    print("KERNEL_OK")
</pallas_src>

<mosaic_0001>
module attributes {stable_mosaic.version = 11 : i64} {
  func.func @_vae_rbf_kernel(%arg0: i32, %arg1: memref<8x32xf32, #tpu.memory_space<vmem>>, %arg2: memref<8x16xf32, #tpu.memory_space<vmem>>, %arg3: memref<240x128xbf16, #tpu.memory_space<vmem>>, %arg4: memref<16x128xf32, #tpu.memory_space<vmem>>, %arg5: memref<8x128xf32, #tpu.memory_space<vmem>>) attributes {dimension_semantics = [#tpu.dimension_semantics<parallel>], iteration_bounds = array<i64: 1>, scalar_prefetch = 0 : i64, scratch_operands = 0 : i64, tpu.core_type = #tpu.core_type<tc>, window_params = [{transform_indices = @transform_0, window_bounds = array<i64: 8, 32>}, {transform_indices = @transform_1, window_bounds = array<i64: 8, 16>}, {pipeline_mode = #tpu.pipeline_mode<synchronous>, transform_indices = @transform_2, window_bounds = array<i64: 240, 128>}, {pipeline_mode = #tpu.pipeline_mode<synchronous>, transform_indices = @transform_3, window_bounds = array<i64: 16, 128>}, {transform_indices = @transform_4, window_bounds = array<i64: 8, 128>}]} {
    %c0 = arith.constant 0 : index
    %c0_0 = arith.constant 0 : index
    %0 = vector.load %arg1[%c0, %c0_0] : memref<8x32xf32, #tpu.memory_space<vmem>>, vector<8x32xf32>
    %c0_1 = arith.constant 0 : index
    %c0_2 = arith.constant 0 : index
    %1 = vector.load %arg2[%c0_1, %c0_2] : memref<8x16xf32, #tpu.memory_space<vmem>>, vector<8x16xf32>
    %2 = arith.mulf %0, %0 : vector<8x32xf32>
    %cst = arith.constant dense<0.000000e+00> : vector<8xf32>
    %3 = vector.multi_reduction <add>, %2, %cst [1] : vector<8x32xf32> to vector<8xf32>
    %4 = vector.shape_cast %3 : vector<8xf32> to vector<8x1xf32>
    %5 = arith.truncf %0 : vector<8x32xf32> to vector<8x32xbf16>
    %c0_3 = arith.constant 0 : index
    %c0_4 = arith.constant 0 : index
    %6 = vector.load %arg3[%c0_3, %c0_4] : memref<240x128xbf16, #tpu.memory_space<vmem>>, vector<32x32xbf16>
    %cst_5 = arith.constant dense<0.000000e+00> : vector<8x32xf32>
    %7 = tpu.matmul %5, %6, %cst_5 {dimension_numbers = #tpu.dot_dimension_numbers<[1], [0], [0], [1], [0, 0, 1, 1], [], []>} : vector<8x32xbf16>, vector<32x32xbf16>, vector<8x32xf32> -> vector<8x32xf32>
    %c1 = arith.constant 1 : index
    %c0_6 = arith.constant 0 : index
    %8 = vector.load %arg4[%c1, %c0_6] : memref<16x128xf32, #tpu.memory_space<vmem>>, vector<1x32xf32>
    %9 = vector.broadcast %4 : vector<8x1xf32> to vector<8x32xf32>
    %10 = vector.broadcast %8 : vector<1x32xf32> to vector<8x32xf32>
    %11 = arith.mulf %9, %10 : vector<8x32xf32>
    %c0_7 = arith.constant 0 : index
    %c0_8 = arith.constant 0 : index
    %12 = vector.load %arg4[%c0_7, %c0_8] : memref<16x128xf32, #tpu.memory_space<vmem>>, vector<1x32xf32>
    %13 = vector.broadcast %12 : vector<1x32xf32> to vector<8x32xf32>
    %14 = arith.addf %11, %13 : vector<8x32xf32>
    %15 = arith.addf %14, %7 : vector<8x32xf32>
    %cst_9 = arith.constant 0.000000e+00 : f32
    %16 = vector.broadcast %cst_9 : f32 to vector<8x32xf32>
    %17 = arith.minimumf %15, %16 : vector<8x32xf32>
    %18 = math.exp %17 : vector<8x32xf32>
    %19 = arith.truncf %18 : vector<8x32xf32> to vector<8x32xbf16>
    %c32 = arith.constant 32 : index
    %c0_10 = arith.constant 0 : index
    %20 = vector.load %arg3[%c32, %c0_10] : memref<240x128xbf16, #tpu.memory_space<vmem>>, vector<32x32xbf16>
    %cst_11 = arith.constant dense<0.000000e+00> : vector<8x32xf32>
    %21 = tpu.matmul %19, %20, %cst_11 {dimension_numbers = #tpu.dot_dimension_numbers<[1], [0], [0], [1], [0, 0, 1, 1], [], []>} : vector<8x32xbf16>, vector<32x32xbf16>, vector<8x32xf32> -> vector<8x32xf32>
    %c2 = arith.constant 2 : index
    %c0_12 = arith.constant 0 : index
    %22 = vector.load %arg4[%c2, %c0_12] : memref<16x128xf32, #tpu.memory_space<vmem>>, vector<1x32xf32>
    %23 = vector.broadcast %22 : vector<1x32xf32> to vector<8x32xf32>
    %24 = arith.addf %21, %23 : vector<8x32xf32>
    %25 = math.tanh %24 : vector<8x32xf32>
    %26 = arith.mulf %25, %25 : vector<8x32xf32>
    %cst_13 = arith.constant dense<0.000000e+00> : vector<8xf32>
    %27 = vector.multi_reduction <add>, %26, %cst_13 [1] : vector<8x32xf32> to vector<8xf32>
    %28 = vector.shape_cast %27 : vector<8xf32> to vector<8x1xf32>
    %29 = arith.truncf %25 : vector<8x32xf32> to vector<8x32xbf16>
    %c64 = arith.constant 64 : index
    %c0_14 = arith.constant 0 : index
    %30 = vector.load %arg3[%c64, %c0_14] : memref<240x128xbf16, #tpu.memory_space<vmem>>, vector<32x32xbf16>
    %cst_15 = arith.constant dense<0.000000e+00> : vector<8x32xf32>
    %31 = tpu.matmul %29, %30, %cst_15 {dimension_numbers = #tpu.dot_dimension_numbers<[1], [0], [0], [1], [0, 0, 1, 1], [], []>} : vector<8x32xbf16>, vector<32x32xbf16>, vector<8x32xf32> -> vector<8x32xf32>
    %c4 = arith.constant 4 : index
    %c0_16 = arith.constant 0 : index
    %32 = vector.load %arg4[%c4, %c0_16] : memref<16x128xf32, #tpu.memory_space<vmem>>, vector<1x32xf32>
    %33 = vector.broadcast %28 : vector<8x1xf32> to vector<8x32xf32>
    %34 = vector.broadcast %32 : vector<1x32xf32> to vector<8x32xf32>
    %35 = arith.mulf %33, %34 : vector<8x32xf32>
    %c3 = arith.constant 3 : index
    %c0_17 = arith.constant 0 : index
    %36 = vector.load %arg4[%c3, %c0_17] : memref<16x128xf32, #tpu.memory_space<vmem>>, vector<1x32xf32>
    %37 = vector.broadcast %36 : vector<1x32xf32> to vector<8x32xf32>
    %38 = arith.addf %35, %37 : vector<8x32xf32>
    %39 = arith.addf %38, %31 : vector<8x32xf32>
    %cst_18 = arith.constant 0.000000e+00 : f32
    %40 = vector.broadcast %cst_18 : f32 to vector<8x32xf32>
    %41 = arith.minimumf %39, %40 : vector<8x32xf32>
    %42 = math.exp %41 : vector<8x32xf32>
    %43 = math.tanh %42 : vector<8x32xf32>
    %44 = arith.truncf %43 : vector<8x32xf32> to vector<8x32xbf16>
    %c96 = arith.constant 96 : index
    %c0_19 = arith.constant 0 : index
    %45 = vector.load %arg3[%c96, %c0_19] : memref<240x128xbf16, #tpu.memory_space<vmem>>, vector<32x32xbf16>
    %cst_20 = arith.constant dense<0.000000e+00> : vector<8x32xf32>
    %46 = tpu.matmul %44, %45, %cst_20 {dimension_numbers = #tpu.dot_dimension_numbers<[1], [0], [0], [1], [0, 0, 1, 1], [], []>} : vector<8x32xbf16>, vector<32x32xbf16>, vector<8x32xf32> -> vector<8x32xf32>
    %c5 = arith.constant 5 : index
    %c0_21 = arith.constant 0 : index
    %47 = vector.load %arg4[%c5, %c0_21] : memref<16x128xf32, #tpu.memory_space<vmem>>, vector<1x32xf32>
    %48 = vector.broadcast %47 : vector<1x32xf32> to vector<8x32xf32>
    %49 = arith.addf %46, %48 : vector<8x32xf32>
    %50 = vector.extract_strided_slice %49 {offsets = [0, 0], sizes = [8, 16], strides = [1, 1]} : vector<8x32xf32> to vector<8x16xf32>
    %51 = vector.extract_strided_slice %49 {offsets = [0, 16], sizes = [8, 16], strides = [1, 1]} : vector<8x32xf32> to vector<8x16xf32>
    %cst_22 = arith.constant 5.000000e-01 : f32
    %52 = vector.broadcast %cst_22 : f32 to vector<8x16xf32>
    %53 = arith.mulf %52, %51 : vector<8x16xf32>
    %54 = math.exp %53 : vector<8x16xf32>
    %55 = arith.mulf %1, %54 : vector<8x16xf32>
    %56 = arith.addf %50, %55 : vector<8x16xf32>
    %57 = arith.mulf %56, %56 : vector<8x16xf32>
    %cst_23 = arith.constant dense<0.000000e+00> : vector<8xf32>
    %58 = vector.multi_reduction <add>, %57, %cst_23 [1] : vector<8x16xf32> to vector<8xf32>
    %59 = vector.shape_cast %58 : vector<8xf32> to vector<8x1xf32>
    %60 = arith.truncf %56 : vector<8x16xf32> to vector<8x16xbf16>
    %c128 = arith.constant 128 : index
    %c0_24 = arith.constant 0 : index
    %61 = vector.load %arg3[%c128, %c0_24] : memref<240x128xbf16, #tpu.memory_space<vmem>>, vector<16x32xbf16>
    %cst_25 = arith.constant dense<0.000000e+00> : vector<8x32xf32>
    %62 = tpu.matmul %60, %61, %cst_25 {dimension_numbers = #tpu.dot_dimension_numbers<[1], [0], [0], [1], [0, 0, 1, 1], [], []>} : vector<8x16xbf16>, vector<16x32xbf16>, vector<8x32xf32> -> vector<8x32xf32>
    %c7 = arith.constant 7 : index
    %c0_26 = arith.constant 0 : index
    %63 = vector.load %arg4[%c7, %c0_26] : memref<16x128xf32, #tpu.memory_space<vmem>>, vector<1x32xf32>
    %64 = vector.broadcast %59 : vector<8x1xf32> to vector<8x32xf32>
    %65 = vector.broadcast %63 : vector<1x32xf32> to vector<8x32xf32>
    %66 = arith.mulf %64, %65 : vector<8x32xf32>
    %c6 = arith.constant 6 : index
    %c0_27 = arith.constant 0 : index
    %67 = vector.load %arg4[%c6, %c0_27] : memref<16x128xf32, #tpu.memory_space<vmem>>, vector<1x32xf32>
    %68 = vector.broadcast %67 : vector<1x32xf32> to vector<8x32xf32>
    %69 = arith.addf %66, %68 : vector<8x32xf32>
    %70 = arith.addf %69, %62 : vector<8x32xf32>
    %cst_28 = arith.constant 0.000000e+00 : f32
    %71 = vector.broadcast %cst_28 : f32 to vector<8x32xf32>
    %72 = arith.minimumf %70, %71 : vector<8x32xf32>
    %73 = math.exp %72 : vector<8x32xf32>
    %74 = arith.truncf %73 : vector<8x32xf32> to vector<8x32xbf16>
    %c144 = arith.constant 144 : index
    %c0_29 = arith.constant 0 : index
    %75 = vector.load %arg3[%c144, %c0_29] : memref<240x128xbf16, #tpu.memory_space<vmem>>, vector<32x32xbf16>
    %cst_30 = arith.constant dense<0.000000e+00> : vector<8x32xf32>
    %76 = tpu.matmul %74, %75, %cst_30 {dimension_numbers = #tpu.dot_dimension_numbers<[1], [0], [0], [1], [0, 0, 1, 1], [], []>} : vector<8x32xbf16>, vector<32x32xbf16>, vector<8x32xf32> -> vector<8x32xf32>
    %c8 = arith.constant 8 : index
    %c0_31 = arith.constant 0 : index
    %77 = vector.load %arg4[%c8, %c0_31] : memref<16x128xf32, #tpu.memory_space<vmem>>, vector<1x32xf32>
    %78 = vector.broadcast %77 : vector<1x32xf32> to vector<8x32xf32>
    %79 = arith.addf %76, %78 : vector<8x32xf32>
    %80 = math.tanh %79 : vector<8x32xf32>
    %81 = arith.mulf %80, %80 : vector<8x32xf32>
    %cst_32 = arith.constant dense<0.000000e+00> : vector<8xf32>
    %82 = vector.multi_reduction <add>, %81, %cst_32 [1] : vector<8x32xf32> to vector<8xf32>
    %83 = vector.shape_cast %82 : vector<8xf32> to vector<8x1xf32>
    %84 = arith.truncf %80 : vector<8x32xf32> to vector<8x32xbf16>
    %c176 = arith.constant 176 : index
    %c0_33 = arith.constant 0 : index
    %85 = vector.load %arg3[%c176, %c0_33] : memref<240x128xbf16, #tpu.memory_space<vmem>>, vector<32x32xbf16>
    %cst_34 = arith.constant dense<0.000000e+00> : vector<8x32xf32>
    %86 = tpu.matmul %84, %85, %cst_34 {dimension_numbers = #tpu.dot_dimension_numbers<[1], [0], [0], [1], [0, 0, 1, 1], [], []>} : vector<8x32xbf16>, vector<32x32xbf16>, vector<8x32xf32> -> vector<8x32xf32>
    %c10 = arith.constant 10 : index
    %c0_35 = arith.constant 0 : index
    %87 = vector.load %arg4[%c10, %c0_35] : memref<16x128xf32, #tpu.memory_space<vmem>>, vector<1x32xf32>
    %88 = vector.broadcast %83 : vector<8x1xf32> to vector<8x32xf32>
    %89 = vector.broadcast %87 : vector<1x32xf32> to vector<8x32xf32>
    %90 = arith.mulf %88, %89 : vector<8x32xf32>
    %c9 = arith.constant 9 : index
    %c0_36 = arith.constant 0 : index
    %91 = vector.load %arg4[%c9, %c0_36] : memref<16x128xf32, #tpu.memory_space<vmem>>, vector<1x32xf32>
    %92 = vector.broadcast %91 : vector<1x32xf32> to vector<8x32xf32>
    %93 = arith.addf %90, %92 : vector<8x32xf32>
    %94 = arith.addf %93, %86 : vector<8x32xf32>
    %cst_37 = arith.constant 0.000000e+00 : f32
    %95 = vector.broadcast %cst_37 : f32 to vector<8x32xf32>
    %96 = arith.minimumf %94, %95 : vector<8x32xf32>
    %97 = math.exp %96 : vector<8x32xf32>
    %98 = math.tanh %97 : vector<8x32xf32>
    %99 = arith.truncf %98 : vector<8x32xf32> to vector<8x32xbf16>
    %c208 = arith.constant 208 : index
    %c0_38 = arith.constant 0 : index
    %100 = vector.load %arg3[%c208, %c0_38] : memref<240x128xbf16, #tpu.memory_space<vmem>>, vector<32x32xbf16>
    %cst_39 = arith.constant dense<0.000000e+00> : vector<8x32xf32>
    %101 = tpu.matmul %99, %100, %cst_39 {dimension_numbers = #tpu.dot_dimension_numbers<[1], [0], [0], [1], [0, 0, 1, 1], [], []>} : vector<8x32xbf16>, vector<32x32xbf16>, vector<8x32xf32> -> vector<8x32xf32>
    %c11 = arith.constant 11 : index
    %c0_40 = arith.constant 0 : index
    %102 = vector.load %arg4[%c11, %c0_40] : memref<16x128xf32, #tpu.memory_space<vmem>>, vector<1x32xf32>
    %103 = vector.broadcast %102 : vector<1x32xf32> to vector<8x32xf32>
    %104 = arith.addf %101, %103 : vector<8x32xf32>
    %c0_41 = arith.constant 0 : index
    %c0_42 = arith.constant 0 : index
    %105 = vector.load %arg5[%c0_41, %c0_42] : memref<8x128xf32, #tpu.memory_space<vmem>>, vector<8x32xf32>
    tpu.vector_store %arg5[%c0_41, %c0_42], %104 {strides = array<i32>} : memref<8x128xf32, #tpu.memory_space<vmem>>, vector<8x32xf32>,
    %c0_43 = arith.constant 0 : index
    %c32_44 = arith.constant 32 : index
    %106 = vector.load %arg5[%c0_43, %c32_44] : memref<8x128xf32, #tpu.memory_space<vmem>>, vector<8x16xf32>
    tpu.vector_store %arg5[%c0_43, %c32_44], %56 {strides = array<i32>} : memref<8x128xf32, #tpu.memory_space<vmem>>, vector<8x16xf32>,
    %c0_45 = arith.constant 0 : index
    %c48 = arith.constant 48 : index
    %107 = vector.load %arg5[%c0_45, %c48] : memref<8x128xf32, #tpu.memory_space<vmem>>, vector<8x16xf32>
    tpu.vector_store %arg5[%c0_45, %c48], %50 {strides = array<i32>} : memref<8x128xf32, #tpu.memory_space<vmem>>, vector<8x16xf32>,
    %c0_46 = arith.constant 0 : index
    %c64_47 = arith.constant 64 : index
    %108 = vector.load %arg5[%c0_46, %c64_47] : memref<8x128xf32, #tpu.memory_space<vmem>>, vector<8x16xf32>
    tpu.vector_store %arg5[%c0_46, %c64_47], %54 {strides = array<i32>} : memref<8x128xf32, #tpu.memory_space<vmem>>, vector<8x16xf32>,
    %c0_48 = arith.constant 0 : index
    %c80 = arith.constant 80 : index
    %109 = vector.load %arg5[%c0_48, %c80] : memref<8x128xf32, #tpu.memory_space<vmem>>, vector<8x16xf32>
    tpu.vector_store %arg5[%c0_48, %c80], %51 {strides = array<i32>} : memref<8x128xf32, #tpu.memory_space<vmem>>, vector<8x16xf32>,
    %cst_49 = arith.constant 0.000000e+00 : f32
    %110 = vector.broadcast %cst_49 : f32 to vector<8x32xf32>
    %c0_50 = arith.constant 0 : index
    %c96_51 = arith.constant 96 : index
    %111 = vector.load %arg5[%c0_50, %c96_51] : memref<8x128xf32, #tpu.memory_space<vmem>>, vector<8x32xf32>
    tpu.vector_store %arg5[%c0_50, %c96_51], %110 {strides = array<i32>} : memref<8x128xf32, #tpu.memory_space<vmem>>, vector<8x32xf32>,
    return
  }
  func.func @transform_0(%arg0: i32) -> (i32, i32) {
    %c0_i32 = arith.constant 0 : i32
    %c0_i32_0 = arith.constant 0 : i32
    return %arg0, %c0_i32 : i32, i32
  }
  func.func @transform_1(%arg0: i32) -> (i32, i32) {
    %c0_i32 = arith.constant 0 : i32
    %c0_i32_0 = arith.constant 0 : i32
    return %arg0, %c0_i32 : i32, i32
  }
  func.func @transform_2(%arg0: i32) -> (i32, i32) {
    %c0_i32 = arith.constant 0 : i32
    %c0_i32_0 = arith.constant 0 : i32
    %c0_i32_1 = arith.constant 0 : i32
    return %c0_i32, %c0_i32_0 : i32, i32
  }
  func.func @transform_3(%arg0: i32) -> (i32, i32) {
    %c0_i32 = arith.constant 0 : i32
    %c0_i32_0 = arith.constant 0 : i32
    %c0_i32_1 = arith.constant 0 : i32
    return %c0_i32, %c0_i32_0 : i32, i32
  }
  func.func @transform_4(%arg0: i32) -> (i32, i32) {
    %c0_i32 = arith.constant 0 : i32
    %c0_i32_0 = arith.constant 0 : i32
    return %arg0, %c0_i32 : i32, i32
  }
}

</mosaic_0001>

<llo_original>
// kernel: forward.1
$region0: #{forward.1}
  #allocation0 [shape = 'u32[]', space=smem, size = 0x4, offset = 0x4, fixed_abs, tag = 'smem constant byte address 0x4 - core index']
  #allocation1 [shape = 'u32[144,128]{1,0:T(1,128)}', space=vmem, size = 0x12000, scoped, tag = 'internal scratch']
  %s0 = inlined_call_operand.hbm [shape: f32[8,32], index: 0, kind: input, shape index: {}]
  %s1 = inlined_call_operand.hbm [shape: f32[8,16], index: 1, kind: input, shape index: {}]
  %s2 = inlined_call_operand.hbm [shape: bf16[240,128], index: 2, kind: input, shape index: {}]
  %s3 = inlined_call_operand.hbm [shape: f32[16,128], index: 3, kind: input, shape index: {}]
  %s4 = inlined_call_operand.vmem [shape: f32[8,128], index: 4, kind: output, shape index: {}]
  %s5 = sld [smem:[#allocation0]]
  $region42: #{forward.1} parent=0
    _
  %s7 = ssub.s32 1, %s5
  %s8 = scalar_select 0, %s7, %s5
  $region1: #{forward.1} parent=0
    #allocation2 [shape = 'u8[4096]{0}', space=vmem, size = 0x1000, scoped, tag = 'input window, operand 0, single buffered']
    #allocation3 [shape = 's32[1]{0}', space=sflag, size = 0x4, scoped, tag = 'scoped memory for forward.1']
    #allocation4 [shape = 'u8[4096]{0}', space=vmem, size = 0x1000, scoped, tag = 'input window, operand 1, single buffered']
    #allocation5 [shape = 's32[1]{0}', space=sflag, size = 0x4, scoped, tag = 'scoped memory for forward.1']
    #allocation6 [shape = 'u8[61440]{0}', space=vmem, size = 0xf000, scoped, tag = 'input window, operand 2, single buffered']
    #allocation7 [shape = 'u8[8192]{0}', space=vmem, size = 0x2000, scoped, tag = 'input window, operand 3, single buffered']
    #allocation8 [shape = 's32[1]{0}', space=sflag, size = 0x4, scoped, tag = 'scoped memory for forward.1']
    %9 = vsyncpa [#allocation3], 0
    %10 = vsyncpa [#allocation5], 0
    %11 = vsyncpa [#allocation8], 0
    // Predicated region
    $region2: #{forward.1} parent=1 // pred_check
      _
    $region3: #{forward.1} parent=1 // pred_check_branch
      %13 = sbr.rel (0) target = $region5
    $region4: #{forward.1} parent=1 // pred_region
      %s15 = ssub.s32 128, 128
      %16 = vsyncadd [#allocation3], %s15
      %s18 = sshll.u32 [#allocation2], 4
      %s19 = int_to_ptr.vmem [resolvable:$true] %s18
      %21 = dma.hbm_to_vmem [thread:$0]  %s0, 128, %s19, [#allocation3]
    $region5: #{forward.1} parent=1 // pred_fallthru
      _
    // Predicated region
    $region6: #{forward.1} parent=1 // pred_check
      _
    $region7: #{forward.1} parent=1 // pred_check_branch
      %23 = sbr.rel (0) target = $region9
    $region8: #{forward.1} parent=1 // pred_region
      %s25 = ssub.s32 128, 128
      %26 = vsyncadd [#allocation5], %s25
      %s28 = sshll.u32 [#allocation4], 4
      %s29 = int_to_ptr.vmem [resolvable:$true] %s28
      %31 = dma.hbm_to_vmem [thread:$0]  %s1, 128, %s29, [#allocation5]
    $region9: #{forward.1} parent=1 // pred_fallthru
      _
    // Predicated region
    $region10: #{forward.1} parent=1 // pred_check
      _
    $region11: #{forward.1} parent=1 // pred_check_branch
      %33 = sbr.rel (0) target = $region13
    $region12: #{forward.1} parent=1 // pred_region
      %s35 = ssub.s32 1920, 1920
      %36 = vsyncadd [#allocation5], %s35
      %s37 = sshll.u32 [#allocation6], 4
      %s38 = int_to_ptr.vmem [resolvable:$true] %s37
      %43 = dma.hbm_to_vmem [thread:$0]  %s2, 1920, %s38, [#allocation5], 64, 64, 4
    $region13: #{forward.1} parent=1 // pred_fallthru
      _
    // Predicated region
    $region14: #{forward.1} parent=1 // pred_check
      _
    $region15: #{forward.1} parent=1 // pred_check_branch
      %45 = sbr.rel (0) target = $region17
    $region16: #{forward.1} parent=1 // pred_region
      %s47 = ssub.s32 256, 256
      %48 = vsyncadd [#allocation8], %s47
      %s49 = sshll.u32 [#allocation7], 4
      %s50 = int_to_ptr.vmem [resolvable:$true] %s49
      %55 = dma.hbm_to_vmem [thread:$0]  %s3, 256, %s50, [#allocation8], 128, 128, 8
    $region17: #{forward.1} parent=1 // pred_fallthru
      _
    // Predicated region
    $region18: #{forward.1} parent=1 // pred_check
      _
    $region19: #{forward.1} parent=1 // pred_check_branch
      %57 = sbr.rel (0) target = $region21
    $region20: #{forward.1} parent=1 // pred_region
      %58 = dma.done [#allocation3], 128
    $region21: #{forward.1} parent=1 // pred_fallthru
      _
    // Predicated region
    $region22: #{forward.1} parent=1 // pred_check
      _
    $region23: #{forward.1} parent=1 // pred_check_branch
      %60 = sbr.rel (0) target = $region25
    $region24: #{forward.1} parent=1 // pred_region
      %61 = dma.done [#allocation5], 128
    $region25: #{forward.1} parent=1 // pred_fallthru
      _
    // Predicated region
    $region26: #{forward.1} parent=1 // pred_check
      _
    $region27: #{forward.1} parent=1 // pred_check_branch
      %63 = sbr.rel (0) target = $region29
    $region28: #{forward.1} parent=1 // pred_region
      %64 = dma.done [#allocation5], 1920
    $region29: #{forward.1} parent=1 // pred_fallthru
      _
    // Predicated region
    $region30: #{forward.1} parent=1 // pred_check
      _
    $region31: #{forward.1} parent=1 // pred_check_branch
      %66 = sbr.rel (0) target = $region33
    $region32: #{forward.1} parent=1 // pred_region
      %67 = dma.done [#allocation8], 256
    $region33: #{forward.1} parent=1 // pred_fallthru
      _
    %v69 = vld [vmem:[#allocation2] sm:$0xff]
    %v70 = vld [vmem:[#allocation4] sm:$0xff]
    %v71 = vmul.f32 %v69, %v69
    %vm72 = vcmask 261120
    %v73 = vsel %vm72, %v71, 0.0
    %74 = vadd.xlane.f32.xlu0 %v73
    %v75 = vpop.xlane.xlu0 %74
    %v76 = vpack.c.bf16 %v69, %v69
    %v77 = vld [vmem:[#allocation6] sm:$0xf]
    %v78 = vld [vmem:[#allocation6 + $0x4] sm:$0xf]
    %v79 = vld [vmem:[#allocation6 + $0x8] sm:$0xf]
    %v80 = vld [vmem:[#allocation6 + $0xc] sm:$0xf]
    %v85 = vunpack.c.l.b16 %v77
    %v86 = vunpack.c.l.b16 %v78
    %v87 = vunpack.c.l.b16 %v79
    %v88 = vunpack.c.l.b16 %v80
    %v89 = vpack.c.b16 %v86, %v85
    %v90 = vpack.c.b16 %v88, %v87
    %v94 = vsel %vm72, %v76, 0
    %96 = vmatprep.subr.bf16.mxu0 0
    %97 = vmatpush1.bf16.msra.mxu0 0
    %98 = vmatprep.subr.bf16.mxu0 0
    %99 = vmatpush1.bf16.msra.mxu0 0
    %100 = vmatprep.subr.bf16.mxu0 0
    %101 = vmatpush1.bf16.msra.mxu0 0
    %102 = vmatprep.subr.bf16.mxu0 0
    %103 = vmatpush1.bf16.msra.mxu0 0
    %104 = vmatprep.subr.bf16.mxu0 0
    %105 = vmatpush1.bf16.msra.mxu0 0
    %106 = vmatprep.subr.bf16.mxu0 0
    %107 = vmatpush1.bf16.msra.mxu0 0
    %108 = vmatprep.subr.bf16.mxu0 0
    %109 = vmatpush1.bf16.msra.mxu0 %v90
    %110 = vmatprep.subr.bf16.mxu0 0
    %111 = vmatpush1.bf16.msra.mxu0 %v89
    %112 = vmatprep.subr.bf16.mxu0 0
    %113 = vmatpush2.bf16.msra.mxu0 0
    %114 = vmatprep.subr.bf16.mxu0 0
    %115 = vmatpush2.bf16.msra.mxu0 0
    %116 = vmatprep.subr.bf16.mxu0 0
    %117 = vmatpush2.bf16.msra.mxu0 0
    %118 = vmatprep.subr.bf16.mxu0 0
    %119 = vmatpush2.bf16.msra.mxu0 0
    %120 = vmatprep.subr.bf16.mxu0 0
    %121 = vmatpush2.bf16.msra.mxu0 0
    %122 = vmatprep.subr.bf16.mxu0 0
    %123 = vmatpush2.bf16.msra.mxu0 0
    %124 = vmatprep.subr.bf16.mxu0 0
    %125 = vmatpush2.bf16.msra.mxu0 0
    %126 = vmatprep.subr.bf16.mxu0 0
    %127 = vmatpush2.bf16.msra.mxu0 0
    %128 = vmatprep.mubr.bf16.mxu0 0
    %129 = vmatmul.mubr.bf16.gmra.mxu0 %v94
    %v130 = vpop.f32.mrf.mxu0
    %v131 = vadd.f32 0.0, %v130
    %v132 = vpop.f32.mrf.mxu0
    %v133 = vpop.f32.mrf.mxu0
    %v134 = vpop.f32.mrf.mxu0
    %135 = vdwg.mxu0
    %v136 = vld [vmem:[#allocation7 + $0x1] sm:$0x1]
    %v137 = vlaneseq
    %v138 = vshrl.u32 %v137, 7
    %v139 = vsub.s32 0, %v138
    %v140 = vrot.slane %v136, %v139
    %v141 = vmul.f32 %v75, %v140
    %v142 = vld [vmem:[#allocation7] sm:$0x1]
    %v143 = vlaneseq
    %v144 = vshrl.u32 %v143, 7
    %v145 = vsub.s32 0, %v144
    %v146 = vrot.slane %v142, %v145
    %v147 = vadd.f32 %v141, %v146
    %v148 = vadd.f32 %v147, %v131
    %v149 = vmin.f32 %v148, 0.0
    %v150 = vmul.f32 %v149, 1.442695
    %v151 = vpow.pop %v150
    %v152 = vpack.c.bf16 %v151, %v151
    %v153 = vld [vmem:[#allocation6 + $0x10] sm:$0xf]
    %v154 = vld [vmem:[#allocation6 + $0x14] sm:$0xf]
    %v155 = vld [vmem:[#allocation6 + $0x18] sm:$0xf]
    %v156 = vld [vmem:[#allocation6 + $0x1c] sm:$0xf]
    %v157 = vld [vmem:[#allocation7 + $0x2] sm:$0x1]
    %v158 = vlaneseq
    %v159 = vshrl.u32 %v158, 7
    %v160 = vsub.s32 0, %v159
    %v161 = vrot.slane %v157, %v160
    %v166 = vunpack.c.l.b16 %v153
    %v167 = vunpack.c.l.b16 %v154
    %v168 = vunpack.c.l.b16 %v155
    %v169 = vunpack.c.l.b16 %v156
    %v170 = vpack.c.b16 %v167, %v166
    %v171 = vpack.c.b16 %v169, %v168
    %v175 = vsel %vm72, %v152, 0
    %177 = vmatprep.subr.bf16.mxu0 0
    %178 = vmatpush1.bf16.msra.mxu0 0
    %179 = vmatprep.subr.bf16.mxu0 0
    %180 = vmatpush1.bf16.msra.mxu0 0
    %181 = vmatprep.subr.bf16.mxu0 0
    %182 = vmatpush1.bf16.msra.mxu0 0
    %183 = vmatprep.subr.bf16.mxu0 0
    %184 = vmatpush1.bf16.msra.mxu0 0
    %185 = vmatprep.subr.bf16.mxu0 0
    %186 = vmatpush1.bf16.msra.mxu0 0
    %187 = vmatprep.subr.bf16.mxu0 0
    %188 = vmatpush1.bf16.msra.mxu0 0
    %189 = vmatprep.subr.bf16.mxu0 0
    %190 = vmatpush1.bf16.msra.mxu0 %v171
    %191 = vmatprep.subr.bf16.mxu0 0
    %192 = vmatpush1.bf16.msra.mxu0 %v170
    %193 = vmatprep.subr.bf16.mxu0 0
    %194 = vmatpush2.bf16.msra.mxu0 0
    %195 = vmatprep.subr.bf16.mxu0 0
    %196 = vmatpush2.bf16.msra.mxu0 0
    %197 = vmatprep.subr.bf16.mxu0 0
    %198 = vmatpush2.bf16.msra.mxu0 0
    %199 = vmatprep.subr.bf16.mxu0 0
    %200 = vmatpush2.bf16.msra.mxu0 0
    %201 = vmatprep.subr.bf16.mxu0 0
    %202 = vmatpush2.bf16.msra.mxu0 0
    %203 = vmatprep.subr.bf16.mxu0 0
    %204 = vmatpush2.bf16.msra.mxu0 0
    %205 = vmatprep.subr.bf16.mxu0 0
    %206 = vmatpush2.bf16.msra.mxu0 0
    %207 = vmatprep.subr.bf16.mxu0 0
    %208 = vmatpush2.bf16.msra.mxu0 0
    %209 = vmatprep.mubr.bf16.mxu0 0
    %210 = vmatmul.mubr.bf16.gmra.mxu0 %v175
    %v211 = vpop.f32.mrf.mxu0
    %v212 = vadd.f32 %v161, %v211
    %v213 = vpop.f32.mrf.mxu0
    %v214 = vpop.f32.mrf.mxu0
    %v215 = vpop.f32.mrf.mxu0
    %216 = vdwg.mxu0
    %v217 = vtanh.pop %v212
    %v218 = vmul.f32 %v217, %v217
    %v219 = vsel %vm72, %v218, 0.0
    %220 = vadd.xlane.f32.xlu0 %v219
    %v221 = vpop.xlane.xlu0 %220
    %v222 = vpack.c.bf16 %v217, %v217
    %v223 = vld [vmem:[#allocation6 + $0x20] sm:$0xf]
    %v224 = vld [vmem:[#allocation6 + $0x24] sm:$0xf]
    %v225 = vld [vmem:[#allocation6 + $0x28] sm:$0xf]
    %v226 = vld [vmem:[#allocation6 + $0x2c] sm:$0xf]
    %v231 = vunpack.c.l.b16 %v223
    %v232 = vunpack.c.l.b16 %v224
    %v233 = vunpack.c.l.b16 %v225
    %v234 = vunpack.c.l.b16 %v226
    %v235 = vpack.c.b16 %v232, %v231
    %v236 = vpack.c.b16 %v234, %v233
    %v240 = vsel %vm72, %v222, 0
    %242 = vmatprep.subr.bf16.mxu0 0
    %243 = vmatpush1.bf16.msra.mxu0 0
    %244 = vmatprep.subr.bf16.mxu0 0
    %245 = vmatpush1.bf16.msra.mxu0 0
    %246 = vmatprep.subr.bf16.mxu0 0
    %247 = vmatpush1.bf16.msra.mxu0 0
    %248 = vmatprep.subr.bf16.mxu0 0
    %249 = vmatpush1.bf16.msra.mxu0 0
    %250 = vmatprep.subr.bf16.mxu0 0
    %251 = vmatpush1.bf16.msra.mxu0 0
    %252 = vmatprep.subr.bf16.mxu0 0
    %253 = vmatpush1.bf16.msra.mxu0 0
    %254 = vmatprep.subr.bf16.mxu0 0
    %255 = vmatpush1.bf16.msra.mxu0 %v236
    %256 = vmatprep.subr.bf16.mxu0 0
    %257 = vmatpush1.bf16.msra.mxu0 %v235
    %258 = vmatprep.subr.bf16.mxu0 0
    %259 = vmatpush2.bf16.msra.mxu0 0
    %260 = vmatprep.subr.bf16.mxu0 0
    %261 = vmatpush2.bf16.msra.mxu0 0
    %262 = vmatprep.subr.bf16.mxu0 0
    %263 = vmatpush2.bf16.msra.mxu0 0
    %264 = vmatprep.subr.bf16.mxu0 0
    %265 = vmatpush2.bf16.msra.mxu0 0
    %266 = vmatprep.subr.bf16.mxu0 0
    %267 = vmatpush2.bf16.msra.mxu0 0
    %268 = vmatprep.subr.bf16.mxu0 0
    %269 = vmatpush2.bf16.msra.mxu0 0
    %270 = vmatprep.subr.bf16.mxu0 0
    %271 = vmatpush2.bf16.msra.mxu0 0
    %272 = vmatprep.subr.bf16.mxu0 0
    %273 = vmatpush2.bf16.msra.mxu0 0
    %274 = vmatprep.mubr.bf16.mxu0 0
    %275 = vmatmul.mubr.bf16.gmra.mxu0 %v240
    %v276 = vpop.f32.mrf.mxu0
    %v277 = vadd.f32 0.0, %v276
    %v278 = vpop.f32.mrf.mxu0
    %v279 = vpop.f32.mrf.mxu0
    %v280 = vpop.f32.mrf.mxu0
    %281 = vdwg.mxu0
    %v282 = vld [vmem:[#allocation7 + $0x4] sm:$0x1]
    %v283 = vlaneseq
    %v284 = vshrl.u32 %v283, 7
    %v285 = vsub.s32 0, %v284
    %v286 = vrot.slane %v282, %v285
    %v287 = vmul.f32 %v221, %v286
    %v288 = vld [vmem:[#allocation7 + $0x3] sm:$0x1]
    %v289 = vlaneseq
    %v290 = vshrl.u32 %v289, 7
    %v291 = vsub.s32 0, %v290
    %v292 = vrot.slane %v288, %v291
    %v293 = vadd.f32 %v287, %v292
    %v294 = vadd.f32 %v293, %v277
    %v295 = vmin.f32 %v294, 0.0
    %v296 = vmul.f32 %v295, 1.442695
    %v297 = vpow.pop %v296
    %v298 = vtanh.pop %v297
    %v299 = vpack.c.bf16 %v298, %v298
    %v300 = vld [vmem:[#allocation6 + $0x30] sm:$0xf]
    %v301 = vld [vmem:[#allocation6 + $0x34] sm:$0xf]
    %v302 = vld [vmem:[#allocation6 + $0x38] sm:$0xf]
    %v303 = vld [vmem:[#allocation6 + $0x3c] sm:$0xf]
    %v304 = vld [vmem:[#allocation7 + $0x5] sm:$0x1]
    %v305 = vlaneseq
    %v306 = vshrl.u32 %v305, 7
    %v307 = vsub.s32 0, %v306
    %v308 = vrot.slane %v304, %v307
    %v313 = vunpack.c.l.b16 %v300
    %v314 = vunpack.c.l.b16 %v301
    %v315 = vunpack.c.l.b16 %v302
    %v316 = vunpack.c.l.b16 %v303
    %v317 = vpack.c.b16 %v314, %v313
    %v318 = vpack.c.b16 %v316, %v315
    %v322 = vsel %vm72, %v299, 0
    %324 = vmatprep.subr.bf16.mxu0 0
    %325 = vmatpush1.bf16.msra.mxu0 0
    %326 = vmatprep.subr.bf16.mxu0 0
    %327 = vmatpush1.bf16.msra.mxu0 0
    %328 = vmatprep.subr.bf16.mxu0 0
    %329 = vmatpush1.bf16.msra.mxu0 0
    %330 = vmatprep.subr.bf16.mxu0 0
    %331 = vmatpush1.bf16.msra.mxu0 0
    %332 = vmatprep.subr.bf16.mxu0 0
    %333 = vmatpush1.bf16.msra.mxu0 0
    %334 = vmatprep.subr.bf16.mxu0 0
    %335 = vmatpush1.bf16.msra.mxu0 0
    %336 = vmatprep.subr.bf16.mxu0 0
    %337 = vmatpush1.bf16.msra.mxu0 %v318
    %338 = vmatprep.subr.bf16.mxu0 0
    %339 = vmatpush1.bf16.msra.mxu0 %v317
    %340 = vmatprep.subr.bf16.mxu0 0
    %341 = vmatpush2.bf16.msra.mxu0 0
    %342 = vmatprep.subr.bf16.mxu0 0
    %343 = vmatpush2.bf16.msra.mxu0 0
    %344 = vmatprep.subr.bf16.mxu0 0
    %345 = vmatpush2.bf16.msra.mxu0 0
    %346 = vmatprep.subr.bf16.mxu0 0
    %347 = vmatpush2.bf16.msra.mxu0 0
    %348 = vmatprep.subr.bf16.mxu0 0
    %349 = vmatpush2.bf16.msra.mxu0 0
    %350 = vmatprep.subr.bf16.mxu0 0
    %351 = vmatpush2.bf16.msra.mxu0 0
    %352 = vmatprep.subr.bf16.mxu0 0
    %353 = vmatpush2.bf16.msra.mxu0 0
    %354 = vmatprep.subr.bf16.mxu0 0
    %355 = vmatpush2.bf16.msra.mxu0 0
    %356 = vmatprep.mubr.bf16.mxu0 0
    %357 = vmatmul.mubr.bf16.gmra.mxu0 %v322
    %v358 = vpop.f32.mrf.mxu0
    %v359 = vadd.f32 %v308, %v358
    %v360 = vpop.f32.mrf.mxu0
    %v361 = vpop.f32.mrf.mxu0
    %v362 = vpop.f32.mrf.mxu0
    %363 = vdwg.mxu0
    %v364 = vmul.f32 %v359, 0.5
    %v365 = vmul.f32 %v364, 1.442695
    %v366 = vpow.pop %v365
    %368 = vrot.lane.b32.xlu0 %v366, 112
    %v369 = vpop.permute.xlu0 %368
    %v371 = vmul.f32 %v70, %v369
    %v372 = vadd.f32 %v359, %v371
    %v373 = vmul.f32 %v372, %v372
    %vm374 = vcmask 130048
    %v375 = vsel %vm374, %v373, 0.0
    %376 = vadd.xlane.f32.xlu0 %v375
    %v377 = vpop.xlane.xlu0 %376
    %v378 = vpack.c.bf16 %v372, %v372
    %v379 = vld [vmem:[#allocation6 + $0x40] sm:$0xf]
    %v380 = vld [vmem:[#allocation6 + $0x44] sm:$0xf]
    %v383 = vunpack.c.l.b16 %v379
    %v384 = vunpack.c.l.b16 %v380
    %v385 = vpack.c.b16 %v384, %v383
    %v388 = vsel %vm374, %v378, 0
    %390 = vmatprep.subr.bf16.mxu0 0
    %391 = vmatpush1.bf16.msra.mxu0 0
    %392 = vmatprep.subr.bf16.mxu0 0
    %393 = vmatpush1.bf16.msra.mxu0 0
    %394 = vmatprep.subr.bf16.mxu0 0
    %395 = vmatpush1.bf16.msra.mxu0 0
    %396 = vmatprep.subr.bf16.mxu0 0
    %397 = vmatpush1.bf16.msra.mxu0 0
    %398 = vmatprep.subr.bf16.mxu0 0
    %399 = vmatpush1.bf16.msra.mxu0 0
    %400 = vmatprep.subr.bf16.mxu0 0
    %401 = vmatpush1.bf16.msra.mxu0 0
    %402 = vmatprep.subr.bf16.mxu0 0
    %403 = vmatpush1.bf16.msra.mxu0 0
    %404 = vmatprep.subr.bf16.mxu0 0
    %405 = vmatpush1.bf16.msra.mxu0 %v385
    %406 = vmatprep.subr.bf16.mxu0 0
    %407 = vmatpush2.bf16.msra.mxu0 0
    %408 = vmatprep.subr.bf16.mxu0 0
    %409 = vmatpush2.bf16.msra.mxu0 0
    %410 = vmatprep.subr.bf16.mxu0 0
    %411 = vmatpush2.bf16.msra.mxu0 0
    %412 = vmatprep.subr.bf16.mxu0 0
    %413 = vmatpush2.bf16.msra.mxu0 0
    %414 = vmatprep.subr.bf16.mxu0 0
    %415 = vmatpush2.bf16.msra.mxu0 0
    %416 = vmatprep.subr.bf16.mxu0 0
    %417 = vmatpush2.bf16.msra.mxu0 0
    %418 = vmatprep.subr.bf16.mxu0 0
    %419 = vmatpush2.bf16.msra.mxu0 0
    %420 = vmatprep.subr.bf16.mxu0 0
    %421 = vmatpush2.bf16.msra.mxu0 0
    %422 = vmatprep.mubr.bf16.mxu0 0
    %423 = vmatmul.mubr.bf16.gmra.mxu0 %v388
    %v424 = vpop.f32.mrf.mxu0
    %v425 = vadd.f32 0.0, %v424
    %v426 = vpop.f32.mrf.mxu0
    %v427 = vpop.f32.mrf.mxu0
    %v428 = vpop.f32.mrf.mxu0
    %429 = vdwg.mxu0
    %v430 = vld [vmem:[#allocation7 + $0x7] sm:$0x1]
    %v431 = vlaneseq
    %v432 = vshrl.u32 %v431, 7
    %v433 = vsub.s32 0, %v432
    %v434 = vrot.slane %v430, %v433
    %v435 = vmul.f32 %v377, %v434
    %v436 = vld [vmem:[#allocation7 + $0x6] sm:$0x1]
    %v437 = vlaneseq
    %v438 = vshrl.u32 %v437, 7
    %v439 = vsub.s32 0, %v438
    %v440 = vrot.slane %v436, %v439
    %v441 = vadd.f32 %v435, %v440
    %v442 = vadd.f32 %v441, %v425
    %v443 = vmin.f32 %v442, 0.0
    %v444 = vmul.f32 %v443, 1.442695
    %v445 = vpow.pop %v444
    %v446 = vpack.c.bf16 %v445, %v445
    %v447 = vld [vmem:[#allocation6 + $0x48] sm:$0xf]
    %v448 = vld [vmem:[#allocation6 + $0x4c] sm:$0xf]
    %v449 = vld [vmem:[#allocation6 + $0x50] sm:$0xf]
    %v450 = vld [vmem:[#allocation6 + $0x54] sm:$0xf]
    %v451 = vld [vmem:[#allocation7 + $0x8] sm:$0x1]
    %v452 = vlaneseq
    %v453 = vshrl.u32 %v452, 7
    %v454 = vsub.s32 0, %v453
    %v455 = vrot.slane %v451, %v454
    %v460 = vunpack.c.l.b16 %v447
    %v461 = vunpack.c.l.b16 %v448
    %v462 = vunpack.c.l.b16 %v449
    %v463 = vunpack.c.l.b16 %v450
    %v464 = vpack.c.b16 %v461, %v460
    %v465 = vpack.c.b16 %v463, %v462
    %v469 = vsel %vm72, %v446, 0
    %471 = vmatprep.subr.bf16.mxu0 0
    %472 = vmatpush1.bf16.msra.mxu0 0
    %473 = vmatprep.subr.bf16.mxu0 0
    %474 = vmatpush1.bf16.msra.mxu0 0
    %475 = vmatprep.subr.bf16.mxu0 0
    %476 = vmatpush1.bf16.msra.mxu0 0
    %477 = vmatprep.subr.bf16.mxu0 0
    %478 = vmatpush1.bf16.msra.mxu0 0
    %479 = vmatprep.subr.bf16.mxu0 0
    %480 = vmatpush1.bf16.msra.mxu0 0
    %481 = vmatprep.subr.bf16.mxu0 0
    %482 = vmatpush1.bf16.msra.mxu0 0
    %483 = vmatprep.subr.bf16.mxu0 0
    %484 = vmatpush1.bf16.msra.mxu0 %v465
    %485 = vmatprep.subr.bf16.mxu0 0
    %486 = vmatpush1.bf16.msra.mxu0 %v464
    %487 = vmatprep.subr.bf16.mxu0 0
    %488 = vmatpush2.bf16.msra.mxu0 0
    %489 = vmatprep.subr.bf16.mxu0 0
    %490 = vmatpush2.bf16.msra.mxu0 0
    %491 = vmatprep.subr.bf16.mxu0 0
    %492 = vmatpush2.bf16.msra.mxu0 0
    %493 = vmatprep.subr.bf16.mxu0 0
    %494 = vmatpush2.bf16.msra.mxu0 0
    %495 = vmatprep.subr.bf16.mxu0 0
    %496 = vmatpush2.bf16.msra.mxu0 0
    %497 = vmatprep.subr.bf16.mxu0 0
    %498 = vmatpush2.bf16.msra.mxu0 0
    %499 = vmatprep.subr.bf16.mxu0 0
    %500 = vmatpush2.bf16.msra.mxu0 0
    %501 = vmatprep.subr.bf16.mxu0 0
    %502 = vmatpush2.bf16.msra.mxu0 0
    %503 = vmatprep.mubr.bf16.mxu0 0
    %504 = vmatmul.mubr.bf16.gmra.mxu0 %v469
    %v505 = vpop.f32.mrf.mxu0
    %v506 = vadd.f32 %v455, %v505
    %v507 = vpop.f32.mrf.mxu0
    %v508 = vpop.f32.mrf.mxu0
    %v509 = vpop.f32.mrf.mxu0
    %510 = vdwg.mxu0
    %v511 = vtanh.pop %v506
    %v512 = vmul.f32 %v511, %v511
    %v513 = vsel %vm72, %v512, 0.0
    %514 = vadd.xlane.f32.xlu0 %v513
    %v515 = vpop.xlane.xlu0 %514
    %v516 = vpack.c.bf16 %v511, %v511
    %v517 = vld [vmem:[#allocation6 + $0x58] sm:$0xf]
    %v518 = vld [vmem:[#allocation6 + $0x5c] sm:$0xf]
    %v519 = vld [vmem:[#allocation6 + $0x60] sm:$0xf]
    %v520 = vld [vmem:[#allocation6 + $0x64] sm:$0xf]
    %v525 = vunpack.c.l.b16 %v517
    %v526 = vunpack.c.l.b16 %v518
    %v527 = vunpack.c.l.b16 %v519
    %v528 = vunpack.c.l.b16 %v520
    %v529 = vpack.c.b16 %v526, %v525
    %v530 = vpack.c.b16 %v528, %v527
    %v534 = vsel %vm72, %v516, 0
    %536 = vmatprep.subr.bf16.mxu0 0
    %537 = vmatpush1.bf16.msra.mxu0 0
    %538 = vmatprep.subr.bf16.mxu0 0
    %539 = vmatpush1.bf16.msra.mxu0 0
    %540 = vmatprep.subr.bf16.mxu0 0
    %541 = vmatpush1.bf16.msra.mxu0 0
    %542 = vmatprep.subr.bf16.mxu0 0
    %543 = vmatpush1.bf16.msra.mxu0 0
    %544 = vmatprep.subr.bf16.mxu0 0
    %545 = vmatpush1.bf16.msra.mxu0 0
    %546 = vmatprep.subr.bf16.mxu0 0
    %547 = vmatpush1.bf16.msra.mxu0 0
    %548 = vmatprep.subr.bf16.mxu0 0
    %549 = vmatpush1.bf16.msra.mxu0 %v530
    %550 = vmatprep.subr.bf16.mxu0 0
    %551 = vmatpush1.bf16.msra.mxu0 %v529
    %552 = vmatprep.subr.bf16.mxu0 0
    %553 = vmatpush2.bf16.msra.mxu0 0
    %554 = vmatprep.subr.bf16.mxu0 0
    %555 = vmatpush2.bf16.msra.mxu0 0
    %556 = vmatprep.subr.bf16.mxu0 0
    %557 = vmatpush2.bf16.msra.mxu0 0
    %558 = vmatprep.subr.bf16.mxu0 0
    %559 = vmatpush2.bf16.msra.mxu0 0
    %560 = vmatprep.subr.bf16.mxu0 0
    %561 = vmatpush2.bf16.msra.mxu0 0
    %562 = vmatprep.subr.bf16.mxu0 0
    %563 = vmatpush2.bf16.msra.mxu0 0
    %564 = vmatprep.subr.bf16.mxu0 0
    %565 = vmatpush2.bf16.msra.mxu0 0
    %566 = vmatprep.subr.bf16.mxu0 0
    %567 = vmatpush2.bf16.msra.mxu0 0
    %568 = vmatprep.mubr.bf16.mxu0 0
    %569 = vmatmul.mubr.bf16.gmra.mxu0 %v534
    %v570 = vpop.f32.mrf.mxu0
    %v571 = vadd.f32 0.0, %v570
    %v572 = vpop.f32.mrf.mxu0
    %v573 = vpop.f32.mrf.mxu0
    %v574 = vpop.f32.mrf.mxu0
    %575 = vdwg.mxu0
    %v576 = vld [vmem:[#allocation7 + $0xa] sm:$0x1]
    %v577 = vlaneseq
    %v578 = vshrl.u32 %v577, 7
    %v579 = vsub.s32 0, %v578
    %v580 = vrot.slane %v576, %v579
    %v581 = vmul.f32 %v515, %v580
    %v582 = vld [vmem:[#allocation7 + $0x9] sm:$0x1]
    %v583 = vlaneseq
    %v584 = vshrl.u32 %v583, 7
    %v585 = vsub.s32 0, %v584
    %v586 = vrot.slane %v582, %v585
    %v587 = vadd.f32 %v581, %v586
    %v588 = vadd.f32 %v587, %v571
    %v589 = vmin.f32 %v588, 0.0
    %v590 = vmul.f32 %v589, 1.442695
    %v591 = vpow.pop %v590
    %v592 = vtanh.pop %v591
    %v593 = vpack.c.bf16 %v592, %v592
    %v594 = vld [vmem:[#allocation6 + $0x68] sm:$0xf]
    %v595 = vld [vmem:[#allocation6 + $0x6c] sm:$0xf]
    %v596 = vld [vmem:[#allocation6 + $0x70] sm:$0xf]
    %v597 = vld [vmem:[#allocation6 + $0x74] sm:$0xf]
    %v598 = vld [vmem:[#allocation7 + $0xb] sm:$0x1]
    %v599 = vlaneseq
    %v600 = vshrl.u32 %v599, 7
    %v601 = vsub.s32 0, %v600
    %v602 = vrot.slane %v598, %v601
    %v607 = vunpack.c.l.b16 %v594
    %v608 = vunpack.c.l.b16 %v595
    %v609 = vunpack.c.l.b16 %v596
    %v610 = vunpack.c.l.b16 %v597
    %v611 = vpack.c.b16 %v608, %v607
    %v612 = vpack.c.b16 %v610, %v609
    %v616 = vsel %vm72, %v593, 0
    %618 = vmatprep.subr.bf16.mxu0 0
    %619 = vmatpush1.bf16.msra.mxu0 0
    %620 = vmatprep.subr.bf16.mxu0 0
    %621 = vmatpush1.bf16.msra.mxu0 0
    %622 = vmatprep.subr.bf16.mxu0 0
    %623 = vmatpush1.bf16.msra.mxu0 0
    %624 = vmatprep.subr.bf16.mxu0 0
    %625 = vmatpush1.bf16.msra.mxu0 0
    %626 = vmatprep.subr.bf16.mxu0 0
    %627 = vmatpush1.bf16.msra.mxu0 0
    %628 = vmatprep.subr.bf16.mxu0 0
    %629 = vmatpush1.bf16.msra.mxu0 0
    %630 = vmatprep.subr.bf16.mxu0 0
    %631 = vmatpush1.bf16.msra.mxu0 %v612
    %632 = vmatprep.subr.bf16.mxu0 0
    %633 = vmatpush1.bf16.msra.mxu0 %v611
    %634 = vmatprep.subr.bf16.mxu0 0
    %635 = vmatpush2.bf16.msra.mxu0 0
    %636 = vmatprep.subr.bf16.mxu0 0
    %637 = vmatpush2.bf16.msra.mxu0 0
    %638 = vmatprep.subr.bf16.mxu0 0
    %639 = vmatpush2.bf16.msra.mxu0 0
    %640 = vmatprep.subr.bf16.mxu0 0
    %641 = vmatpush2.bf16.msra.mxu0 0
    %642 = vmatprep.subr.bf16.mxu0 0
    %643 = vmatpush2.bf16.msra.mxu0 0
    %644 = vmatprep.subr.bf16.mxu0 0
    %645 = vmatpush2.bf16.msra.mxu0 0
    %646 = vmatprep.subr.bf16.mxu0 0
    %647 = vmatpush2.bf16.msra.mxu0 0
    %648 = vmatprep.subr.bf16.mxu0 0
    %649 = vmatpush2.bf16.msra.mxu0 0
    %650 = vmatprep.mubr.bf16.mxu0 0
    %651 = vmatmul.mubr.bf16.gmra.mxu0 %v616
    %v652 = vpop.f32.mrf.mxu0
    %v653 = vadd.f32 %v602, %v652
    %v654 = vpop.f32.mrf.mxu0
    %v655 = vpop.f32.mrf.mxu0
    %v656 = vpop.f32.mrf.mxu0
    %657 = vdwg.mxu0
    %658 = vst.msk [vmem:[%s4] sm:$0xff] %vm72, %v653
    %660 = vrot.lane.b32.xlu0 %v372, 32
    %v661 = vpop.permute.xlu0 %660
    %vm663 = vcmask 392448
    %664 = vst.msk [vmem:[%s4] sm:$0xff] %vm663, %v661
    %666 = vrot.lane.b32.xlu0 %v359, 48
    %v667 = vpop.permute.xlu0 %666
    %vm669 = vcmask 523648
    %670 = vst.msk [vmem:[%s4] sm:$0xff] %vm669, %v667
    %671 = vrot.lane.b32.xlu0 %v366, 48
    %v672 = vpop.permute.xlu0 %671
    %vm674 = vcmask 654848
    %675 = vst.msk [vmem:[%s4] sm:$0xff] %vm674, %v672
    %676 = vrot.lane.b32.xlu0 %v359, 64
    %v677 = vpop.permute.xlu0 %676
    %vm679 = vcmask 786048
    %680 = vst.msk [vmem:[%s4] sm:$0xff] %vm679, %v677
    %vm681 = vcmask 1048320
    %682 = vst.msk [vmem:[%s4] sm:$0xff] %vm681, 0.0
    // Predicated region
    $region34: #{forward.1} parent=1 // pred_check
      _
    $region35: #{forward.1} parent=1 // pred_check_branch
      %684 = sbr.rel (0) target = $region37
    $region36: #{forward.1} parent=1 // pred_region
      _
    $region37: #{forward.1} parent=1 // pred_fallthru
      _
    // Predicated region
    $region38: #{forward.1} parent=1 // pred_check
      _
    $region39: #{forward.1} parent=1 // pred_check_branch
      %686 = sbr.rel (0) target = $region41
    $region40: #{forward.1} parent=1 // pred_region
      _
    $region41: #{forward.1} parent=1 // pred_fallthru
      _
    %687 = vsyncpa [#allocation3], 1
    %688 = vsyncpa [#allocation5], 1
    %689 = vsyncpa [#allocation8], 1

</llo_original>
